<compile_context>
chip_gen: v7x
topology: tpu7x:2x2x1
jax: 0.10.0
libtpu: 0.0.40
codegen_flags: <defaults>
</compile_context>

<pallas_src>
import functools

import jax
import jax.numpy as jnp
from jax import lax
from jax.experimental import pallas as pl
from jax.experimental.pallas import tpu as pltpu


def _round_up(x, m):
    return (x + m - 1) // m * m


def _resident_spec(block_shape, index_map):
    """BlockSpec for a constant-index (never re-DMA'd) VMEM-resident operand.

    Requests single buffering (pl.Buffered(1)) so the resident block costs one
    copy of VMEM instead of the default two; falls back to the default spec on
    jax builds without pipeline_mode support.
    """
    try:
        return pl.BlockSpec(block_shape, index_map, pipeline_mode=pl.Buffered(1))
    except (AttributeError, TypeError, ValueError):
        return pl.BlockSpec(block_shape, index_map)


def _tpu_vmem_capacity_bytes(default=128 * 1024 * 1024):
    """Best-effort physical VMEM capacity (v5e/v6e: 128 MiB, v7x: 64 MiB/TC)."""
    try:
        info = pltpu.get_tpu_info()
    except Exception:
        return default
    for attr in ("vmem_capacity_bytes", "vmem_size_bytes", "vmem_bytes"):
        v = getattr(info, attr, None)
        if isinstance(v, (int, float)) and v > 0:
            return int(v)
    return default


def _row_geometry(tm, n_pad, n_rows, n_cols):
    # Global row index so the self-contrast diagonal is correct under row
    # tiling and for contrast_mode='one'.
    g_row = pl.program_id(0) * tm + lax.broadcasted_iota(jnp.int32, (tm, 1), 0)
    col = lax.broadcasted_iota(jnp.int32, (1, n_pad), 1)
    # Additive bias fuses padding-column masking into the matmul epilogue:
    # padded columns sit at ~-1e30 so exp() makes them 0 without a select.
    col_bias = jnp.where(col < n_cols, 0.0, -1e30).astype(jnp.float32)   # [1, Np]
    not_self = g_row != col                                              # [TM, Np]
    row_valid = g_row < n_rows                                           # [TM, 1]
    return col_bias, not_self, row_valid


def _logits_and_logz(a_ref, c_ref, col_bias, not_self, inv_t):
    mxu_dtype = a_ref.dtype
    # Fold 1/temperature into the small [TM, D] operand (not a [TM, N] pass).
    a = (a_ref[...].astype(jnp.float32) * inv_t).astype(mxu_dtype)
    # contrast was pre-transposed to [Dp, Np] in the wrapper -> plain (1,0)
    # contraction, no per-step transpose of the resident matrix.
    adc = jnp.dot(a, c_ref[...], preferred_element_type=jnp.float32)     # [TM, Np]
    biased = adc + col_bias
    # Row max over real columns (diag included, as in PyTorch; the shift
    # cancels exactly in the final loss).  Keep all of this in f32.
    row_max = jnp.max(biased, axis=1, keepdims=True)
    logits = biased - row_max
    # log-sum-exp over non-self columns; padding columns already ~-1e30.
    exp_kept = jnp.where(not_self, jnp.exp(logits), 0.0)
    log_z = jnp.log(jnp.sum(exp_kept, axis=1, keepdims=True))            # [TM, 1]
    return logits, log_z


def _finish_tile(logits, log_z, num, den, row_valid, out_ref, loss_scale):
    # mean_log_prob_pos = sum(w*(logits - log_z))/sum(w) = num/den - log_z
    mean_log_prob_pos = num * pl.reciprocal(den, approx=False) - log_z
    # NOTE: real rows with zero positives give NaN, matching PyTorch. Padding
    # rows hit 0*inf here and are zeroed by the row_valid select (forward only).
    per_row = jnp.where(row_valid, loss_scale * mean_log_prob_pos, 0.0)
    out_ref[...] = jnp.broadcast_to(jnp.sum(per_row), out_ref.shape)


def _supcon_kernel_ids(a_ref, c_ref, aid_ref, cid_ref, out_ref, *,
                       n_rows, n_cols, inv_t, loss_scale):
    tm = a_ref.shape[0]
    n_pad = c_ref.shape[1]
    col_bias, not_self, row_valid = _row_geometry(tm, n_pad, n_rows, n_cols)
    logits, log_z = _logits_and_logz(a_ref, c_ref, col_bias, not_self, inv_t)
    # Positive mask stays bool (no f32 mask tile): [TM,1] ids == [1,Np] ids.
    # Padding rows (-1) / cols (-2) never match each other or real labels >= 0.
    pos = (aid_ref[...] == cid_ref[...]) & not_self
    num = jnp.sum(jnp.where(pos, logits, 0.0), axis=1, keepdims=True)
    den = jnp.sum(pos.astype(jnp.float32), axis=1, keepdims=True)
    _finish_tile(logits, log_z, num, den, row_valid, out_ref, loss_scale)


def _supcon_kernel_mask(a_ref, c_ref, w_ref, out_ref, *,
                        n_rows, n_cols, inv_t, loss_scale):
    tm = a_ref.shape[0]
    n_pad = c_ref.shape[1]
    col_bias, not_self, row_valid = _row_geometry(tm, n_pad, n_rows, n_cols)
    logits, log_z = _logits_and_logz(a_ref, c_ref, col_bias, not_self, inv_t)
    # Mask streamed as bf16 (0/1 values exact); padding rows/cols are zero.
    w = jnp.where(not_self, w_ref[...].astype(jnp.float32), 0.0)
    num = jnp.sum(w * logits, axis=1, keepdims=True)
    den = jnp.sum(w, axis=1, keepdims=True)
    _finish_tile(logits, log_z, num, den, row_valid, out_ref, loss_scale)


def supcon_loss(features, labels=None, mask=None, *, temperature=0.07,
                contrast_mode="all", base_temperature=0.07,
                mxu_dtype=jnp.bfloat16, mask_dtype=jnp.bfloat16, block_m=None):
    """Pallas-TPU SupCon loss (forward), matching the PyTorch reference."""
    if features.ndim < 3:
        raise ValueError("`features` needs to be [bsz, n_views, ...]")
    if labels is not None and mask is not None:
        raise ValueError("Cannot define both `labels` and `mask`")
    bsz, n_views = features.shape[0], features.shape[1]
    features = features.reshape(bsz, n_views, -1).astype(jnp.float32)
    d = features.shape[-1]

    # contrast_feature == torch.cat(torch.unbind(features, dim=1), dim=0)
    contrast = jnp.transpose(features, (1, 0, 2)).reshape(n_views * bsz, d)
    if contrast_mode == "one":
        anchor = features[:, 0]
        anchor_count = 1
    elif contrast_mode == "all":
        anchor = contrast
        anchor_count = n_views
    else:
        raise ValueError(f"Unknown mode: {contrast_mode}")

    m, n = anchor_count * bsz, n_views * bsz
    d_pad = _round_up(d, 128)
    n_pad = _round_up(n, 128)
    itemsize = jnp.dtype(mxu_dtype).itemsize
    mask_itemsize = jnp.dtype(mask_dtype).itemsize

    # --- generation-aware sizing (v7x: 64 MiB VMEM/TC, v5e/v6e: 128 MiB) -----
    vmem_cap = _tpu_vmem_capacity_bytes()
    small_vmem = vmem_cap < 96 * 1024 * 1024
    vmem_limit = min((48 if small_vmem else 100) * 1024 * 1024,
                     int(vmem_cap * 0.8))
    if block_m is None:
        block_m = 128 if small_vmem else 256

    # Row tile: multiple of the mxu_dtype sublane packing (8 f32/16 bf16/32 i8).
    sub = {4: 8, 2: 16, 1: 32}.get(itemsize, 8)
    tm = _round_up(min(block_m, m), sub)

    # Shrink the row tile if live [TM, N_pad] f32 intermediates + the resident
    # (single-buffered) contrast would blow the VMEM budget.
    def _footprint(tm_):
        live = 6 * tm_ * n_pad * 4                    # adc/logits/exp/select temps
        resident = n_pad * d_pad * itemsize           # contrast (Buffered(1))
        anchors = 2 * tm_ * d_pad * itemsize          # double-buffered anchor tile
        mask_blk = 2 * tm_ * n_pad * mask_itemsize if mask is not None else 0
        return live + resident + anchors + mask_blk

    while tm > sub and _footprint(tm) > int(0.8 * vmem_limit):
        tm = max(sub, _round_up(tm // 2, sub))

    m_pad = _round_up(m, tm)
    grid_m = m_pad // tm

    anchor_p = jnp.pad(anchor, ((0, m_pad - m), (0, d_pad - d))).astype(mxu_dtype)
    # Pre-transpose contrast once in the wrapper (cheap one-time XLA transpose)
    # so the kernel matmul needs no per-step transpose of the resident matrix.
    contrast_t_p = jnp.pad(contrast,
                           ((0, n_pad - n), (0, d_pad - d))).T.astype(mxu_dtype)

    common = dict(n_rows=m, n_cols=n, inv_t=1.0 / temperature,
                  loss_scale=-(temperature / base_temperature))

    anchor_spec = pl.BlockSpec((tm, d_pad), lambda i: (i, 0))          # streamed
    contrast_spec = _resident_spec((d_pad, n_pad), lambda i: (0, 0))   # resident
    out_spec = pl.BlockSpec((1, 1, 128), lambda i: (i, 0, 0))          # lane-dense
    out_shape = jax.ShapeDtypeStruct((grid_m, 1, 128), jnp.float32)

    mask_bytes = m_pad * n_pad * mask_itemsize if mask is not None else 0
    cost = pl.CostEstimate(
        flops=2 * m_pad * n_pad * d_pad,
        transcendentals=m_pad * n_pad,
        bytes_accessed=(m_pad * d_pad * itemsize        # anchors streamed once
                        + n_pad * d_pad * itemsize      # resident contrast (1 copy)
                        + mask_bytes
                        + grid_m * 128 * 4))
    params = pltpu.CompilerParams(
        dimension_semantics=("parallel",),               # v7x: shard row tiles
        vmem_limit_bytes=vmem_limit)

    # TODO(synk): for very large N (N_pad >= ~8-16K) add an inner 'arbitrary'
    # grid axis over the contrast dim with online-softmax accumulation so the
    # contrast no longer has to be fully VMEM-resident (matters most on v7x).
    if mask is None:
        # labels / unsupervised path: rebuild the positive mask in-kernel from
        # tiny int32 label vectors (no [M, N] mask is ever materialized).
        if labels is None:
            base_ids = jnp.arange(bsz, dtype=jnp.int32)          # SimCLR eye mask
        else:
            labels = jnp.asarray(labels).reshape(-1)
            if labels.shape[0] != bsz:
                raise ValueError("Num of labels does not match num of features")
            base_ids = labels.astype(jnp.int32)
        c_ids = jnp.tile(base_ids, n_views)                      # view-major order
        a_ids = base_ids if contrast_mode == "one" else c_ids
        a_ids_p = jnp.full((m_pad, 1), -1, jnp.int32).at[:m, 0].set(a_ids)
        c_ids_p = jnp.full((1, n_pad), -2, jnp.int32).at[0, :n].set(c_ids)

        kernel = functools.partial(_supcon_kernel_ids, **common)
        partial_sums = pl.pallas_call(
            kernel,
            grid=(grid_m,),
            in_specs=[anchor_spec, contrast_spec,
                      pl.BlockSpec((tm, 1), lambda i: (i, 0)),      # anchor ids
                      _resident_spec((1, n_pad), lambda i: (0, 0))],  # contrast ids
            out_specs=out_spec,
            out_shape=out_shape,
            compiler_params=params,
            cost_estimate=cost,
        )(anchor_p, contrast_t_p, a_ids_p, c_ids_p)
    else:
        # TODO(synk): an arbitrary/asymmetric mask can't be rebuilt from ids; it
        # is streamed tiled, but in bf16 (0/1 values exact) to halve HBM traffic
        # and the double-buffered [TM, N_pad] VMEM block vs f32.
        mask = jnp.asarray(mask, jnp.float32)
        mask_full = jnp.tile(mask, (anchor_count, n_views))
        w_p = jnp.zeros((m_pad, n_pad), mask_dtype).at[:m, :n].set(
            mask_full.astype(mask_dtype))

        kernel = functools.partial(_supcon_kernel_mask, **common)
        partial_sums = pl.pallas_call(
            kernel,
            grid=(grid_m,),
            in_specs=[anchor_spec, contrast_spec,
                      pl.BlockSpec((tm, n_pad), lambda i: (i, 0))],   # mask rows
            out_specs=out_spec,
            out_shape=out_shape,
            compiler_params=params,
            cost_estimate=cost,
        )(anchor_p, contrast_t_p, w_p)

    # PyTorch: loss.view(anchor_count, bsz).mean()  ==  sum over M rows / M
    return jnp.sum(partial_sums[:, 0, 0]) / m


def supcon_loss_ref(features, labels=None, mask=None, *, temperature=0.07,
                    contrast_mode="all", base_temperature=0.07):
    """Pure-JAX f32 reference mirroring the PyTorch code, for verification."""
    bsz, n_views = features.shape[0], features.shape[1]
    features = features.reshape(bsz, n_views, -1).astype(jnp.float32)
    if labels is not None and mask is not None:
        raise ValueError("Cannot define both `labels` and `mask`")
    if labels is None and mask is None:
        mask = jnp.eye(bsz, dtype=jnp.float32)
    elif labels is not None:
        labels = jnp.asarray(labels).reshape(-1, 1)
        mask = (labels == labels.T).astype(jnp.float32)
    else:
        mask = jnp.asarray(mask, jnp.float32)
    contrast = jnp.transpose(features, (1, 0, 2)).reshape(n_views * bsz, -1)
    if contrast_mode == "one":
        anchor = features[:, 0]
        anchor_count = 1
    else:
        anchor = contrast
        anchor_count = n_views
    adc = jnp.dot(anchor, contrast.T) / temperature
    logits = adc - jnp.max(adc, axis=1, keepdims=True)
    m, n = logits.shape
    mask_full = jnp.tile(mask, (anchor_count, n_views))
    logits_mask = (jnp.arange(m)[:, None] != jnp.arange(n)[None, :]).astype(jnp.float32)
    mask_full = mask_full * logits_mask
    exp_logits = jnp.exp(logits) * logits_mask
    log_prob = logits - jnp.log(jnp.sum(exp_logits, axis=1, keepdims=True))
    mean_log_prob_pos = jnp.sum(mask_full * log_prob, axis=1) / jnp.sum(mask_full, axis=1)
    loss = -(temperature / base_temperature) * mean_log_prob_pos
    return jnp.mean(loss)


if __name__ == "__main__":
    key = jax.random.PRNGKey(0)
    k_feat, k_lab = jax.random.split(key)

    bsz, n_views, dim = 8, 2, 32
    features = jax.random.normal(k_feat, (bsz, n_views, dim), dtype=jnp.float32)
    # SupCon features are usually L2-normalized projections
    features = features / jnp.linalg.norm(features, axis=-1, keepdims=True)
    labels = jax.random.randint(k_lab, (bsz,), 0, 3)

    # Supervised path, f32 MXU operands: tight check against the f32 reference.
    ref = supcon_loss_ref(features, labels=labels)
    loss_f32 = jax.block_until_ready(
        supcon_loss(features, labels=labels, mxu_dtype=jnp.float32))
    assert abs(float(loss_f32) - float(ref)) < 1e-4, (float(loss_f32), float(ref))

    # Supervised path, default bf16 MXU operands: looser tolerance (bf16 logits).
    loss_bf16 = jax.block_until_ready(supcon_loss(features, labels=labels))
    assert abs(float(loss_bf16) - float(ref)) < 5e-2 * max(1.0, abs(float(ref))), (
        float(loss_bf16), float(ref))

    # Unsupervised (SimCLR-degenerate) path.
    ref_u = supcon_loss_ref(features)
    loss_u = jax.block_until_ready(supcon_loss(features, mxu_dtype=jnp.float32))
    assert abs(float(loss_u) - float(ref_u)) < 1e-4, (float(loss_u), float(ref_u))

    # Explicit-mask fallback path (eye mask == unsupervised loss).
    loss_m = jax.block_until_ready(
        supcon_loss(features, mask=jnp.eye(bsz), mxu_dtype=jnp.float32))
    assert abs(float(loss_m) - float(ref_u)) < 1e-4, (float(loss_m), float(ref_u))

    # contrast_mode='one'.
    ref_one = supcon_loss_ref(features, labels=labels, contrast_mode="one")
    loss_one = jax.block_until_ready(
        supcon_loss(features, labels=labels, contrast_mode="one",
                    mxu_dtype=jnp.float32))
    assert abs(float(loss_one) - float(ref_one)) < 1e-4, (float(loss_one), float(ref_one))

    print("KERNEL_OK")
</pallas_src>

<mosaic_0001>
module attributes {stable_mosaic.version = 11 : i64} {
  func.func @_supcon_kernel_ids(%arg0: i32, %arg1: memref<16x128xf32, #tpu.memory_space<vmem>>, %arg2: memref<128x128xf32, #tpu.memory_space<vmem>>, %arg3: memref<16x1xi32, #tpu.memory_space<vmem>>, %arg4: memref<1x128xi32, #tpu.memory_space<vmem>>, %arg5: memref<1x1x128xf32, #tpu.memory_space<vmem>>) attributes {dimension_semantics = [#tpu.dimension_semantics<parallel>], iteration_bounds = array<i64: 1>, scalar_prefetch = 0 : i64, scratch_operands = 0 : i64, tpu.core_type = #tpu.core_type<tc>, window_params = [{transform_indices = @transform_0, window_bounds = array<i64: 16, 128>}, {pipeline_mode = #tpu.pipeline_mode<synchronous>, transform_indices = @transform_1, window_bounds = array<i64: 128, 128>}, {transform_indices = @transform_2, window_bounds = array<i64: 16, 1>}, {pipeline_mode = #tpu.pipeline_mode<synchronous>, transform_indices = @transform_3, window_bounds = array<i64: 1, 128>}, {transform_indices = @transform_4, window_bounds = array<i64: 1, 1, 128>}]} {
    %c16_i32 = arith.constant 16 : i32
    %0 = arith.muli %arg0, %c16_i32 : i32
    %1 = tpu.iota {dimensions = array<i32: 0>} : vector<16x1xi32>
    %2 = vector.broadcast %0 : i32 to vector<16x1xi32>
    %3 = arith.addi %2, %1 : vector<16x1xi32>
    %4 = tpu.iota {dimensions = array<i32: 1>} : vector<1x128xi32>
    %c16_i32_0 = arith.constant 16 : i32
    %5 = vector.broadcast %c16_i32_0 : i32 to vector<1x128xi32>
    %6 = arith.cmpi slt, %4, %5 : vector<1x128xi32>
    %cst = arith.constant 0.000000e+00 : f32
    %cst_1 = arith.constant -1.000000e+30 : f32
    %7 = vector.broadcast %cst : f32 to vector<1x128xf32>
    %8 = vector.broadcast %cst_1 : f32 to vector<1x128xf32>
    %9 = arith.select %6, %7, %8 : vector<1x128xi1>, vector<1x128xf32>
    %10 = vector.broadcast %3 : vector<16x1xi32> to vector<16x128xi32>
    %11 = vector.broadcast %4 : vector<1x128xi32> to vector<16x128xi32>
    %12 = arith.cmpi ne, %10, %11 : vector<16x128xi32>
    %c16_i32_2 = arith.constant 16 : i32
    %13 = vector.broadcast %c16_i32_2 : i32 to vector<16x1xi32>
    %14 = arith.cmpi slt, %3, %13 : vector<16x1xi32>
    %c0 = arith.constant 0 : index
    %c0_3 = arith.constant 0 : index
    %15 = vector.load %arg1[%c0, %c0_3] : memref<16x128xf32, #tpu.memory_space<vmem>>, vector<16x128xf32>
    %cst_4 = arith.constant 14.2857141 : f32
    %16 = vector.broadcast %cst_4 : f32 to vector<16x128xf32>
    %17 = arith.mulf %15, %16 : vector<16x128xf32>
    %c0_5 = arith.constant 0 : index
    %c0_6 = arith.constant 0 : index
    %18 = vector.load %arg2[%c0_5, %c0_6] : memref<128x128xf32, #tpu.memory_space<vmem>>, vector<128x128xf32>
    %cst_7 = arith.constant dense<0.000000e+00> : vector<16x128xf32>
    %19 = tpu.matmul %17, %18, %cst_7 {dimension_numbers = #tpu.dot_dimension_numbers<[1], [0], [0], [1], [0, 0, 1, 1], [], []>} : vector<16x128xf32>, vector<128x128xf32>, vector<16x128xf32> -> vector<16x128xf32>
    %20 = vector.broadcast %9 : vector<1x128xf32> to vector<16x128xf32>
    %21 = arith.addf %19, %20 : vector<16x128xf32>
    %cst_8 = arith.constant dense<0xFF800000> : vector<16xf32>
    %22 = vector.multi_reduction <maximumf>, %21, %cst_8 [1] : vector<16x128xf32> to vector<16xf32>
    %23 = vector.shape_cast %22 : vector<16xf32> to vector<16x1xf32>
    %24 = vector.broadcast %23 : vector<16x1xf32> to vector<16x128xf32>
    %25 = arith.subf %21, %24 : vector<16x128xf32>
    %26 = math.exp %25 : vector<16x128xf32>
    %cst_9 = arith.constant 0.000000e+00 : f32
    %27 = vector.broadcast %cst_9 : f32 to vector<16x128xf32>
    %28 = arith.select %12, %26, %27 : vector<16x128xi1>, vector<16x128xf32>
    %cst_10 = arith.constant dense<0.000000e+00> : vector<16xf32>
    %29 = vector.multi_reduction <add>, %28, %cst_10 [1] : vector<16x128xf32> to vector<16xf32>
    %30 = vector.shape_cast %29 : vector<16xf32> to vector<16x1xf32>
    %31 = math.log %30 : vector<16x1xf32>
    %c0_11 = arith.constant 0 : index
    %c0_12 = arith.constant 0 : index
    %32 = vector.load %arg3[%c0_11, %c0_12] : memref<16x1xi32, #tpu.memory_space<vmem>>, vector<16x1xi32>
    %c0_13 = arith.constant 0 : index
    %c0_14 = arith.constant 0 : index
    %33 = vector.load %arg4[%c0_13, %c0_14] : memref<1x128xi32, #tpu.memory_space<vmem>>, vector<1x128xi32>
    %34 = vector.broadcast %32 : vector<16x1xi32> to vector<16x128xi32>
    %35 = vector.broadcast %33 : vector<1x128xi32> to vector<16x128xi32>
    %36 = arith.cmpi eq, %34, %35 : vector<16x128xi32>
    %37 = arith.andi %36, %12 : vector<16x128xi1>
    %cst_15 = arith.constant 0.000000e+00 : f32
    %38 = vector.broadcast %cst_15 : f32 to vector<16x128xf32>
    %39 = arith.select %37, %25, %38 : vector<16x128xi1>, vector<16x128xf32>
    %cst_16 = arith.constant dense<0.000000e+00> : vector<16xf32>
    %40 = vector.multi_reduction <add>, %39, %cst_16 [1] : vector<16x128xf32> to vector<16xf32>
    %41 = vector.shape_cast %40 : vector<16xf32> to vector<16x1xf32>
    %42 = arith.extui %37 : vector<16x128xi1> to vector<16x128xi32>
    %43 = arith.sitofp %42 : vector<16x128xi32> to vector<16x128xf32>
    %cst_17 = arith.constant dense<0.000000e+00> : vector<16xf32>
    %44 = vector.multi_reduction <add>, %43, %cst_17 [1] : vector<16x128xf32> to vector<16xf32>
    %45 = vector.shape_cast %44 : vector<16xf32> to vector<16x1xf32>
    %46 = tpu.reciprocal %45 : vector<16x1xf32> -> vector<16x1xf32>
    %47 = arith.mulf %41, %46 : vector<16x1xf32>
    %48 = arith.subf %47, %31 : vector<16x1xf32>
    %cst_18 = arith.constant -1.000000e+00 : f32
    %49 = vector.broadcast %cst_18 : f32 to vector<16x1xf32>
    %50 = arith.mulf %49, %48 : vector<16x1xf32>
    %cst_19 = arith.constant 0.000000e+00 : f32
    %51 = vector.broadcast %cst_19 : f32 to vector<16x1xf32>
    %52 = arith.select %14, %50, %51 : vector<16x1xi1>, vector<16x1xf32>
    %53 = vector.shape_cast %52 : vector<16x1xf32> to vector<1x16x1xf32>
    %cst_20 = arith.constant dense<0.000000e+00> : vector<1xf32>
    %54 = vector.multi_reduction <add>, %53, %cst_20 [1, 2] : vector<1x16x1xf32> to vector<1xf32>
    %55 = vector.shape_cast %54 : vector<1xf32> to vector<1x1x1xf32>
    %56 = vector.extract %55[0, 0, 0] : f32 from vector<1x1x1xf32>
    %57 = vector.broadcast %56 : f32 to vector<1x1x128xf32>
    %c0_21 = arith.constant 0 : index
    %c0_22 = arith.constant 0 : index
    %c0_23 = arith.constant 0 : index
    %58 = vector.load %arg5[%c0_21, %c0_22, %c0_23] : memref<1x1x128xf32, #tpu.memory_space<vmem>>, vector<1x1x128xf32>
    tpu.vector_store %arg5[%c0_21, %c0_22, %c0_23], %57 {strides = array<i32>} : memref<1x1x128xf32, #tpu.memory_space<vmem>>, vector<1x1x128xf32>,
    return
  }
  func.func @transform_0(%arg0: i32) -> (i32, i32) {
    %c0_i32 = arith.constant 0 : i32
    %c0_i32_0 = arith.constant 0 : i32
    return %arg0, %c0_i32 : i32, i32
  }
  func.func @transform_1(%arg0: i32) -> (i32, i32) {
    %c0_i32 = arith.constant 0 : i32
    %c0_i32_0 = arith.constant 0 : i32
    %c0_i32_1 = arith.constant 0 : i32
    return %c0_i32, %c0_i32_0 : i32, i32
  }
  func.func @transform_2(%arg0: i32) -> (i32, i32) {
    %c0_i32 = arith.constant 0 : i32
    %c0_i32_0 = arith.constant 0 : i32
    return %arg0, %c0_i32 : i32, i32
  }
  func.func @transform_3(%arg0: i32) -> (i32, i32) {
    %c0_i32 = arith.constant 0 : i32
    %c0_i32_0 = arith.constant 0 : i32
    %c0_i32_1 = arith.constant 0 : i32
    return %c0_i32, %c0_i32_0 : i32, i32
  }
  func.func @transform_4(%arg0: i32) -> (i32, i32, i32) {
    %c0_i32 = arith.constant 0 : i32
    %c0_i32_0 = arith.constant 0 : i32
    %c0_i32_1 = arith.constant 0 : i32
    return %arg0, %c0_i32, %c0_i32_0 : i32, i32, i32
  }
}

</mosaic_0001>

<llo_original>
// kernel: tpu_custom_call.1
$region0: #{tpu_custom_call.1}
  #allocation0 [shape = 'u32[]', space=smem, size = 0x4, offset = 0x4, fixed_abs, tag = 'smem constant byte address 0x4 - core index']
  #allocation1 [shape = 'u32[144,128]{1,0:T(1,128)}', space=vmem, size = 0x12000, scoped, tag = 'internal scratch']
  %s0 = inlined_call_operand.hbm [shape: f32[16,128], index: 0, kind: input, shape index: {}]
  %s1 = inlined_call_operand.hbm [shape: f32[128,128], index: 1, kind: input, shape index: {}]
  %s2 = inlined_call_operand.hbm [shape: s32[16,1], index: 2, kind: input, shape index: {}]
  %s3 = inlined_call_operand.hbm [shape: s32[1,128], index: 3, kind: input, shape index: {}]
  %s4 = inlined_call_operand.hbm [shape: f32[1,1,128], index: 4, kind: output, shape index: {}]
  %s5 = sld [smem:[#allocation0]]
  $region42: #{tpu_custom_call.1} parent=0
    _
  %s7 = ssub.s32 1, %s5
  %s8 = scalar_select 0, %s7, %s5
  $region1: #{tpu_custom_call.1} parent=0
    #allocation2 [shape = 'u8[8192]{0}', space=vmem, size = 0x2000, scoped, tag = 'input window, operand 0, single buffered']
    #allocation3 [shape = 's32[1]{0}', space=sflag, size = 0x4, scoped, tag = 'scoped memory for tpu_custom_call.1']
    #allocation4 [shape = 's32[1]{0}', space=sflag, size = 0x4, scoped, tag = 'scoped memory for tpu_custom_call.1']
    #allocation5 [shape = 'u8[65536]{0}', space=vmem, size = 0x10000, scoped, tag = 'input window, operand 1, single buffered']
    #allocation6 [shape = 's32[1]{0}', space=sflag, size = 0x4, scoped, tag = 'scoped memory for tpu_custom_call.1']
    #allocation7 [shape = 'u8[8192]{0}', space=vmem, size = 0x2000, scoped, tag = 'input window, operand 2, single buffered']
    #allocation8 [shape = 'u8[512]{0}', space=vmem, size = 0x400, scoped, tag = 'input window, operand 3, single buffered']
    #allocation9 [shape = 's32[1]{0}', space=sflag, size = 0x4, scoped, tag = 'scoped memory for tpu_custom_call.1']
    #allocation10 [shape = 'u8[512]{0}', space=vmem, size = 0x400, scoped, tag = 'output window, operand 0, single buffered']
    %9 = vsyncpa [#allocation3], 0
    %10 = vsyncpa [#allocation6], 0
    %11 = vsyncpa [#allocation9], 0
    %12 = vsyncpa [#allocation4], 0
    // Predicated region
    $region2: #{tpu_custom_call.1} parent=1 // pred_check
      _
    $region3: #{tpu_custom_call.1} parent=1 // pred_check_branch
      %14 = sbr.rel (0) target = $region5
    $region4: #{tpu_custom_call.1} parent=1 // pred_region
      %s16 = ssub.s32 256, 256
      %17 = vsyncadd [#allocation3], %s16
      %s18 = sshll.u32 [#allocation2], 4
      %s19 = int_to_ptr.vmem [resolvable:$true] %s18
      %24 = dma.hbm_to_vmem [thread:$0]  %s0, 256, %s19, [#allocation3], 128, 128, 8
    $region5: #{tpu_custom_call.1} parent=1 // pred_fallthru
      _
    // Predicated region
    $region6: #{tpu_custom_call.1} parent=1 // pred_check
      _
    $region7: #{tpu_custom_call.1} parent=1 // pred_check_branch
      %26 = sbr.rel (0) target = $region9
    $region8: #{tpu_custom_call.1} parent=1 // pred_region
      %s28 = ssub.s32 2048, 2048
      %29 = vsyncadd [#allocation6], %s28
      %s30 = sshll.u32 [#allocation5], 4
      %s31 = int_to_ptr.vmem [resolvable:$true] %s30
      %36 = dma.hbm_to_vmem [thread:$0]  %s1, 2048, %s31, [#allocation6], 128, 128, 8
    $region9: #{tpu_custom_call.1} parent=1 // pred_fallthru
      _
    // Predicated region
    $region10: #{tpu_custom_call.1} parent=1 // pred_check
      _
    $region11: #{tpu_custom_call.1} parent=1 // pred_check_branch
      %38 = sbr.rel (0) target = $region13
    $region12: #{tpu_custom_call.1} parent=1 // pred_region
      %s40 = ssub.s32 256, 256
      %41 = vsyncadd [#allocation6], %s40
      %s42 = sshll.u32 [#allocation7], 4
      %s43 = int_to_ptr.vmem [resolvable:$true] %s42
      %48 = dma.hbm_to_vmem [thread:$0]  %s2, 256, %s43, [#allocation6], 128, 128, 8
    $region13: #{tpu_custom_call.1} parent=1 // pred_fallthru
      _
    // Predicated region
    $region14: #{tpu_custom_call.1} parent=1 // pred_check
      _
    $region15: #{tpu_custom_call.1} parent=1 // pred_check_branch
      %50 = sbr.rel (0) target = $region17
    $region16: #{tpu_custom_call.1} parent=1 // pred_region
      %s52 = ssub.s32 16, 16
      %53 = vsyncadd [#allocation9], %s52
      %s55 = sshll.u32 [#allocation8], 4
      %s56 = int_to_ptr.vmem [resolvable:$true] %s55
      %58 = dma.hbm_to_vmem [thread:$0]  %s3, 16, %s56, [#allocation9]
    $region17: #{tpu_custom_call.1} parent=1 // pred_fallthru
      _
    // Predicated region
    $region18: #{tpu_custom_call.1} parent=1 // pred_check
      _
    $region19: #{tpu_custom_call.1} parent=1 // pred_check_branch
      %60 = sbr.rel (0) target = $region21
    $region20: #{tpu_custom_call.1} parent=1 // pred_region
      %61 = dma.done [#allocation3], 256
    $region21: #{tpu_custom_call.1} parent=1 // pred_fallthru
      _
    // Predicated region
    $region22: #{tpu_custom_call.1} parent=1 // pred_check
      _
    $region23: #{tpu_custom_call.1} parent=1 // pred_check_branch
      %63 = sbr.rel (0) target = $region25
    $region24: #{tpu_custom_call.1} parent=1 // pred_region
      %64 = dma.done [#allocation6], 2048
    $region25: #{tpu_custom_call.1} parent=1 // pred_fallthru
      _
    // Predicated region
    $region26: #{tpu_custom_call.1} parent=1 // pred_check
      _
    $region27: #{tpu_custom_call.1} parent=1 // pred_check_branch
      %66 = sbr.rel (0) target = $region29
    $region28: #{tpu_custom_call.1} parent=1 // pred_region
      %67 = dma.done [#allocation6], 256
    $region29: #{tpu_custom_call.1} parent=1 // pred_fallthru
      _
    // Predicated region
    $region30: #{tpu_custom_call.1} parent=1 // pred_check
      _
    $region31: #{tpu_custom_call.1} parent=1 // pred_check_branch
      %69 = sbr.rel (0) target = $region33
    $region32: #{tpu_custom_call.1} parent=1 // pred_region
      %70 = dma.done [#allocation9], 16
    $region33: #{tpu_custom_call.1} parent=1 // pred_fallthru
      _
    %s71 = smul.u32 0, 16
    %v72 = vlaneseq
    %v73 = vshrl.u32 %v72, 7
    %v74 = vadd.s32 %v73, 8
    %v75 = vstv %s71
    %v76 = vadd.s32 %v75, %v73
    %v77 = vadd.s32 %v75, %v74
    %v78 = vlaneseq
    %v79 = vand.u32 %v78, 127
    %vm80 = vcmp.lt.s32.totalorder %v79, 16
    %v81 = vsel %vm80, 0.0, -1e+30
    %vm82 = vcmp.ne.s32.totalorder %v76, %v79
    %vm83 = vcmp.ne.s32.totalorder %v77, %v79
    %vm84 = vcmp.lt.s32.totalorder %v76, 16
    %vm85 = vcmp.lt.s32.totalorder %v77, 16
    %v86 = vld [vmem:[#allocation2] sm:$0xff]
    %v87 = vld [vmem:[#allocation2 + $0x8] sm:$0xff]
    %v88 = vmul.f32 %v86, 14.285714
    %v89 = vmul.f32 %v87, 14.285714
    %v90 = vld [vmem:[#allocation5] sm:$0xff]
    %v91 = vld [vmem:[#allocation5 + $0x8] sm:$0xff]
    %v92 = vld [vmem:[#allocation5 + $0x10] sm:$0xff]
    %v93 = vld [vmem:[#allocation5 + $0x18] sm:$0xff]
    %v94 = vld [vmem:[#allocation5 + $0x20] sm:$0xff]
    %v95 = vld [vmem:[#allocation5 + $0x28] sm:$0xff]
    %v96 = vld [vmem:[#allocation5 + $0x30] sm:$0xff]
    %v97 = vld [vmem:[#allocation5 + $0x38] sm:$0xff]
    %v98 = vld [vmem:[#allocation5 + $0x40] sm:$0xff]
    %v99 = vld [vmem:[#allocation5 + $0x48] sm:$0xff]
    %v100 = vld [vmem:[#allocation5 + $0x50] sm:$0xff]
    %v101 = vld [vmem:[#allocation5 + $0x58] sm:$0xff]
    %v102 = vld [vmem:[#allocation5 + $0x60] sm:$0xff]
    %v103 = vld [vmem:[#allocation5 + $0x68] sm:$0xff]
    %v104 = vld [vmem:[#allocation5 + $0x70] sm:$0xff]
    %v105 = vld [vmem:[#allocation5 + $0x78] sm:$0xff]
    %106 = vmatprep.subr.mxu0 0.0
    %107 = vmatpush1.msra.mxu0 %v90
    %108 = vmatprep.subr.mxu0 0.0
    %109 = vmatpush1.msra.mxu0 %v91
    %110 = vmatprep.subr.mxu0 0.0
    %111 = vmatpush1.msra.mxu0 %v92
    %112 = vmatprep.subr.mxu0 0.0
    %113 = vmatpush1.msra.mxu0 %v93
    %114 = vmatprep.subr.mxu0 0.0
    %115 = vmatpush1.msra.mxu0 %v94
    %116 = vmatprep.subr.mxu0 0.0
    %117 = vmatpush1.msra.mxu0 %v95
    %118 = vmatprep.subr.mxu0 0.0
    %119 = vmatpush1.msra.mxu0 %v96
    %120 = vmatprep.subr.mxu0 0.0
    %121 = vmatpush1.msra.mxu0 %v97
    %122 = vmatprep.subr.mxu0 0.0
    %123 = vmatpush1.msra.mxu0 %v98
    %124 = vmatprep.subr.mxu0 0.0
    %125 = vmatpush1.msra.mxu0 %v99
    %126 = vmatprep.subr.mxu0 0.0
    %127 = vmatpush1.msra.mxu0 %v100
    %128 = vmatprep.subr.mxu0 0.0
    %129 = vmatpush1.msra.mxu0 %v101
    %130 = vmatprep.subr.mxu0 0.0
    %131 = vmatpush1.msra.mxu0 %v102
    %132 = vmatprep.subr.mxu0 0.0
    %133 = vmatpush1.msra.mxu0 %v103
    %134 = vmatprep.subr.mxu0 0.0
    %135 = vmatpush1.msra.mxu0 %v104
    %136 = vmatprep.subr.mxu0 0.0
    %137 = vmatpush1.msra.mxu0 %v105
    %138 = vmatprep.subr.mxu0 0.0
    %139 = vmatpush1.msra.mxu0 0.0
    %140 = vmatprep.subr.mxu0 0.0
    %141 = vmatpush1.msra.mxu0 0.0
    %142 = vmatprep.subr.mxu0 0.0
    %143 = vmatpush1.msra.mxu0 0.0
    %144 = vmatprep.subr.mxu0 0.0
    %145 = vmatpush1.msra.mxu0 0.0
    %146 = vmatprep.subr.mxu0 0.0
    %147 = vmatpush1.msra.mxu0 0.0
    %148 = vmatprep.subr.mxu0 0.0
    %149 = vmatpush1.msra.mxu0 0.0
    %150 = vmatprep.subr.mxu0 0.0
    %151 = vmatpush1.msra.mxu0 0.0
    %152 = vmatprep.subr.mxu0 0.0
    %153 = vmatpush1.msra.mxu0 0.0
    %154 = vmatprep.subr.mxu0 0.0
    %155 = vmatpush1.msra.mxu0 0.0
    %156 = vmatprep.subr.mxu0 0.0
    %157 = vmatpush1.msra.mxu0 0.0
    %158 = vmatprep.subr.mxu0 0.0
    %159 = vmatpush1.msra.mxu0 0.0
    %160 = vmatprep.subr.mxu0 0.0
    %161 = vmatpush1.msra.mxu0 0.0
    %162 = vmatprep.subr.mxu0 0.0
    %163 = vmatpush1.msra.mxu0 0.0
    %164 = vmatprep.subr.mxu0 0.0
    %165 = vmatpush1.msra.mxu0 0.0
    %166 = vmatprep.subr.mxu0 0.0
    %167 = vmatpush1.msra.mxu0 0.0
    %168 = vmatprep.subr.mxu0 0.0
    %169 = vmatpush1.msra.mxu0 0.0
    %170 = vmatprep.mubr.f32.mxu0 0.0
    %171 = vmatmul.mubr.f32.gmra.mrb[0].mxu0 %v88
    %v172 = vpop.f32.mrb[0].mxu0
    %v173 = vadd.f32 %v81, %v172
    %v174 = vpop.f32.mrb[0].mxu0
    %175 = vmatprep.mubr.f32.mxu0 0.0
    %176 = vmatmul.mubr.f32.gmra.mrb[0].mxu0 %v89
    %v177 = vpop.f32.mrb[0].mxu0
    %v178 = vadd.f32 %v81, %v177
    %v179 = vpop.f32.mrb[0].mxu0
    %180 = vdwg.mxu0
    %181 = vmax.xlane.f32.xlu0 %v173
    %v182 = vpop.xlane.xlu0 %181
    %183 = vmax.xlane.f32.xlu0 %v178
    %v184 = vpop.xlane.xlu0 %183
    %v185 = vsub.f32 %v173, %v182
    %v186 = vsub.f32 %v178, %v184
    %v187 = vmul.f32 %v185, 1.442695
    %v188 = vpow.pop %v187
    %v189 = vmul.f32 %v186, 1.442695
    %v190 = vpow.pop %v189
    %v191 = vsel %vm82, %v188, 0.0
    %v192 = vsel %vm83, %v190, 0.0
    %193 = vadd.xlane.f32.xlu0 %v191
    %v194 = vpop.xlane.xlu0 %193
    %195 = vadd.xlane.f32.xlu0 %v192
    %v196 = vpop.xlane.xlu0 %195
    %v197 = vlog2.pop %v194
    %v198 = vmul.f32 %v197, 0.6931472
    %v199 = vlog2.pop %v196
    %v200 = vmul.f32 %v199, 0.6931472
    %v201 = vld [vmem:[#allocation7] sm:$0xff]
    %v202 = vld [vmem:[#allocation7 + $0x8] sm:$0xff]
    %v203 = vld [vmem:[#allocation8] sm:$0x1]
    %204 = vset.pattern.permute.xlu0 0
    %205 = vperm.xlu0 %204, %v201
    %v206 = vpop.permute.xlu0 %205
    %207 = vset.pattern.permute.xlu0 0
    %208 = vperm.xlu0 %207, %v202
    %v209 = vpop.permute.xlu0 %208
    %v210 = vlaneseq
    %v211 = vshrl.u32 %v210, 7
    %v212 = vsub.s32 0, %v211
    %v213 = vrot.slane %v203, %v212
    %vm214 = vcmp.eq.s32.totalorder %v206, %v213
    %vm215 = vcmp.eq.s32.totalorder %v209, %v213
    %vm216 = vmand %vm214, %vm82
    %vm217 = vmand %vm215, %vm83
    %v218 = vsel %vm216, %v185, 0.0
    %v219 = vsel %vm217, %v186, 0.0
    %220 = vadd.xlane.f32.xlu0 %v218
    %v221 = vpop.xlane.xlu0 %220
    %222 = vadd.xlane.f32.xlu0 %v219
    %v223 = vpop.xlane.xlu0 %222
    %v224 = vsel %vm216, 1, 0
    %v225 = vsel %vm217, 1, 0
    %v226 = vcvt.s32.f32 %v224
    %v227 = vcvt.s32.f32 %v225
    %228 = vadd.xlane.f32.xlu0 %v226
    %v229 = vpop.xlane.xlu0 %228
    %230 = vadd.xlane.f32.xlu0 %v227
    %v231 = vpop.xlane.xlu0 %230
    %v232 = vrcp.pop %v229
    %v233 = vrcp.pop %v231
    %v234 = vmul.f32 %v221, %v232
    %v235 = vmul.f32 %v223, %v233
    %v236 = vsub.f32 %v234, %v198
    %v237 = vsub.f32 %v235, %v200
    %v238 = vmul.f32 %v236, -1.0
    %v239 = vmul.f32 %v237, -1.0
    %v240 = vsel %vm84, %v238, 0.0
    %v241 = vsel %vm85, %v239, 0.0
    %vm242 = vcmask 7168
    %v243 = vsel %vm242, %v240, 0.0
    %v244 = vsel %vm242, %v241, 0.0
    %v245 = vadd.f32 %v243, %v244
    %246 = vadd.xlane.f32.xlu0 %v245
    %v247 = vpop.xlane.xlu0 %246
    %v248 = vrot.slane %v247, 4
    %v249 = vadd.f32 %v247, %v248
    %v250 = vrot.slane %v249, 2
    %v251 = vadd.f32 %v249, %v250
    %v252 = vrot.slane %v251, 1
    %v253 = vadd.f32 %v251, %v252
    %s254 = vtos %v253
    %v255 = vstv %s254
    %256 = vst [vmem:[#allocation10] sm:$0x1] %v255
    // Predicated region
    $region34: #{tpu_custom_call.1} parent=1 // pred_check
      _
    $region35: #{tpu_custom_call.1} parent=1 // pred_check_branch
      %258 = sbr.rel (0) target = $region37
    $region36: #{tpu_custom_call.1} parent=1 // pred_region
      %s260 = ssub.s32 16, 16
      %261 = vsyncadd [#allocation4], %s260
      %s263 = sshll.u32 [#allocation10], 4
      %s264 = int_to_ptr.vmem [resolvable:$true] %s263
      %266 = dma.vmem_to_hbm [thread:$0]  %s264, 16, %s4, [#allocation4]
    $region37: #{tpu_custom_call.1} parent=1 // pred_fallthru
      _
    // Predicated region
    $region38: #{tpu_custom_call.1} parent=1 // pred_check
      _
    $region39: #{tpu_custom_call.1} parent=1 // pred_check_branch
      %268 = sbr.rel (0) target = $region41
    $region40: #{tpu_custom_call.1} parent=1 // pred_region
      %269 = dma.done [#allocation4], 16
    $region41: #{tpu_custom_call.1} parent=1 // pred_fallthru
      _
    %270 = vsyncpa [#allocation3], 1
    %271 = vsyncpa [#allocation6], 1
    %272 = vsyncpa [#allocation9], 1
    %273 = vsyncpa [#allocation4], 1

</llo_original>
